<compile_context>
chip_gen: v6e
topology: v6e:2x2x1
jax: 0.10.0
libtpu: 0.0.40
codegen_flags: <defaults>
</compile_context>

<pallas_src>
import functools

import jax
import jax.numpy as jnp
from jax.experimental import pallas as pl
from jax.experimental.pallas import tpu as pltpu


def _harmonic_kernel(freq_ref, x_ref, out_ref, *, n_dims: int):
    """Hot path: broadcasted multiply + sin/cos (VPU/EUP), one full-tile store.

    freq_ref: (1, N)        frequency row (resident, same block every step)
    x_ref:    (TM, D)       input coordinates tile
    out_ref:  (TM, 2*D*N)   [ sin(x_0*f..), ..., sin(x_{D-1}*f..),
                              cos(x_0*f..), ..., cos(x_{D-1}*f..) ]
    """
    freq = freq_ref[...]                       # (1, N)

    sin_parts = []
    cos_parts = []
    # Static unroll over the (small) coordinate dimension D.
    for d in range(n_dims):
        e = x_ref[:, d:d + 1] * freq           # (TM, N) lane-broadcast multiply
        sin_parts.append(jnp.sin(e))
        cos_parts.append(jnp.cos(e))

    # Build the full (TM, 2*D*N) result in registers and store the whole block
    # once — lane-dense, unmasked except for the final partial vreg per row.
    out_ref[...] = jnp.concatenate(sin_parts + cos_parts, axis=-1)


def _pick_row_tile(M: int, row_tile: int) -> int:
    """Large tiles amortize ~0.35us/step overhead; keep >=8 grid steps when M
    allows (v7x shards the parallel axis across 2 TensorCores)."""
    if M >= 8 * row_tile:
        return row_tile
    # Aim for ~8 grid steps, rounded up to a multiple of 8 sublanes.
    tm = max(8, ((pl.cdiv(M, 8) + 7) // 8) * 8)
    return min(row_tile, tm)


def harmonic_embedding(x, n_harmonic_functions=60, omega0=0.1, row_tile=1024):
    """Pallas implementation of HarmonicEmbedding.forward.

    x: float32 array of shape (..., D). Returns (..., 2 * D * n_harmonic_functions).
    """
    x = jnp.asarray(x, jnp.float32)
    *lead, D = x.shape
    N = int(n_harmonic_functions)
    out_dim = 2 * D * N

    # Deterministic "buffer" init, exactly as in the module's __init__.
    # Passed as a small (1, N) input array (Pallas forbids captured constants).
    freqs = (float(omega0)
             * (2.0 ** jnp.arange(N, dtype=jnp.float32))).reshape(1, N)

    # Flatten leading dims into a row axis M (glue reshape, stays in JAX).
    M = 1
    for s in lead:
        M *= int(s)
    x2d = x.reshape(M, D)

    tm = _pick_row_tile(M, row_tile)
    M_pad = pl.cdiv(M, tm) * tm
    if M_pad != M:
        # Padded rows compute sin(0)=0 / cos(0)=1 and are sliced off below.
        x2d = jnp.pad(x2d, ((0, M_pad - M), (0, 0)))

    kernel = functools.partial(_harmonic_kernel, n_dims=D)

    out2d = pl.pallas_call(
        kernel,
        out_shape=jax.ShapeDtypeStruct((M_pad, out_dim), jnp.float32),
        grid_spec=pltpu.PrefetchScalarGridSpec(
            num_scalar_prefetch=0,
            grid=(M_pad // tm,),
            in_specs=[
                pl.BlockSpec((1, N), lambda i: (0, 0)),         # frequencies (resident)
                pl.BlockSpec((tm, D), lambda i: (i, 0)),        # x tile
            ],
            out_specs=pl.BlockSpec((tm, out_dim), lambda i: (i, 0)),
        ),
        compiler_params=pltpu.CompilerParams(
            dimension_semantics=("parallel",)),
    )(freqs, x2d)

    out2d = out2d[:M]
    return out2d.reshape(*lead, out_dim)


def harmonic_embedding_ref(x, n_harmonic_functions=60, omega0=0.1):
    """Pure-JAX reference mirroring the PyTorch forward exactly."""
    x = jnp.asarray(x, jnp.float32)
    frequencies = omega0 * (2.0 ** jnp.arange(n_harmonic_functions,
                                              dtype=jnp.float32))
    embed = (x[..., None] * frequencies).reshape(*x.shape[:-1], -1)
    return jnp.concatenate((jnp.sin(embed), jnp.cos(embed)), axis=-1)


if __name__ == "__main__":
    key = jax.random.PRNGKey(0)
    n_harmonic = 60
    omega0 = 0.1

    # Small ray-point batch: (batch=2, points=64, xyz=3), as the NeRF forward implies.
    x = jax.random.normal(key, (2, 64, 3), dtype=jnp.float32)
    out = harmonic_embedding(x, n_harmonic_functions=n_harmonic, omega0=omega0)
    out = jax.block_until_ready(out)
    ref = harmonic_embedding_ref(x, n_harmonic_functions=n_harmonic, omega0=omega0)
    assert out.shape == (2, 64, 2 * 3 * n_harmonic), out.shape
    assert jnp.allclose(out, ref, atol=1e-4, rtol=1e-4), (
        float(jnp.max(jnp.abs(out - ref))))

    # Second check with a non-tile-multiple row count (exercises padding path
    # and a larger tile).
    x2 = jax.random.normal(jax.random.PRNGKey(1), (4, 1000, 3), dtype=jnp.float32)
    out2 = harmonic_embedding(x2, n_harmonic_functions=n_harmonic, omega0=omega0)
    out2 = jax.block_until_ready(out2)
    ref2 = harmonic_embedding_ref(x2, n_harmonic_functions=n_harmonic, omega0=omega0)
    assert out2.shape == (4, 1000, 2 * 3 * n_harmonic), out2.shape
    assert jnp.allclose(out2, ref2, atol=1e-4, rtol=1e-4), (
        float(jnp.max(jnp.abs(out2 - ref2))))

    print("KERNEL_OK")
</pallas_src>

<mosaic_0001>
module attributes {stable_mosaic.version = 11 : i64} {
  func.func @_harmonic_kernel(%arg0: i32, %arg1: memref<1x60xf32, #tpu.memory_space<vmem>>, %arg2: memref<16x3xf32, #tpu.memory_space<vmem>>, %arg3: memref<16x360xf32, #tpu.memory_space<vmem>>) attributes {dimension_semantics = [#tpu.dimension_semantics<parallel>], iteration_bounds = array<i64: 8>, scalar_prefetch = 0 : i64, scratch_operands = 0 : i64, tpu.core_type = #tpu.core_type<tc>, window_params = [{pipeline_mode = #tpu.pipeline_mode<synchronous>, transform_indices = @transform_0, window_bounds = array<i64: 1, 60>}, {transform_indices = @transform_1, window_bounds = array<i64: 16, 3>}, {transform_indices = @transform_2, window_bounds = array<i64: 16, 360>}]} {
    %c0 = arith.constant 0 : index
    %c0_0 = arith.constant 0 : index
    %0 = vector.load %arg1[%c0, %c0_0] : memref<1x60xf32, #tpu.memory_space<vmem>>, vector<1x60xf32>
    %c0_1 = arith.constant 0 : index
    %c0_2 = arith.constant 0 : index
    %1 = vector.load %arg2[%c0_1, %c0_2] : memref<16x3xf32, #tpu.memory_space<vmem>>, vector<16x1xf32>
    %2 = vector.broadcast %1 : vector<16x1xf32> to vector<16x60xf32>
    %3 = vector.broadcast %0 : vector<1x60xf32> to vector<16x60xf32>
    %4 = arith.mulf %2, %3 : vector<16x60xf32>
    %5 = math.sin %4 : vector<16x60xf32>
    %6 = math.cos %4 : vector<16x60xf32>
    %c0_3 = arith.constant 0 : index
    %c1 = arith.constant 1 : index
    %7 = vector.load %arg2[%c0_3, %c1] : memref<16x3xf32, #tpu.memory_space<vmem>>, vector<16x1xf32>
    %8 = vector.broadcast %7 : vector<16x1xf32> to vector<16x60xf32>
    %9 = vector.broadcast %0 : vector<1x60xf32> to vector<16x60xf32>
    %10 = arith.mulf %8, %9 : vector<16x60xf32>
    %11 = math.sin %10 : vector<16x60xf32>
    %12 = math.cos %10 : vector<16x60xf32>
    %c0_4 = arith.constant 0 : index
    %c2 = arith.constant 2 : index
    %13 = vector.load %arg2[%c0_4, %c2] : memref<16x3xf32, #tpu.memory_space<vmem>>, vector<16x1xf32>
    %14 = vector.broadcast %13 : vector<16x1xf32> to vector<16x60xf32>
    %15 = vector.broadcast %0 : vector<1x60xf32> to vector<16x60xf32>
    %16 = arith.mulf %14, %15 : vector<16x60xf32>
    %17 = math.sin %16 : vector<16x60xf32>
    %18 = math.cos %16 : vector<16x60xf32>
    %19 = tpu.concatenate %5, %11, %17, %6, %12, %18 in 1 : vector<16x60xf32>, vector<16x60xf32>, vector<16x60xf32>, vector<16x60xf32>, vector<16x60xf32>, vector<16x60xf32> -> vector<16x360xf32>
    %c0_5 = arith.constant 0 : index
    %c0_6 = arith.constant 0 : index
    %20 = vector.load %arg3[%c0_5, %c0_6] : memref<16x360xf32, #tpu.memory_space<vmem>>, vector<16x360xf32>
    tpu.vector_store %arg3[%c0_5, %c0_6], %19 {strides = array<i32>} : memref<16x360xf32, #tpu.memory_space<vmem>>, vector<16x360xf32>,
    return
  }
  func.func @transform_0(%arg0: i32) -> (i32, i32) {
    %c0_i32 = arith.constant 0 : i32
    %c0_i32_0 = arith.constant 0 : i32
    %c0_i32_1 = arith.constant 0 : i32
    return %c0_i32, %c0_i32_0 : i32, i32
  }
  func.func @transform_1(%arg0: i32) -> (i32, i32) {
    %c0_i32 = arith.constant 0 : i32
    %c0_i32_0 = arith.constant 0 : i32
    return %arg0, %c0_i32 : i32, i32
  }
  func.func @transform_2(%arg0: i32) -> (i32, i32) {
    %c0_i32 = arith.constant 0 : i32
    %c0_i32_0 = arith.constant 0 : i32
    return %arg0, %c0_i32 : i32, i32
  }
}

</mosaic_0001>

<llo_original>
// kernel: tpu_custom_call.1
$region0: #{tpu_custom_call.1}
  #allocation0 [shape = 'u32[]', space=smem, size = 0x4, offset = 0x4, fixed_abs, tag = 'smem constant byte address 0x4 - core index']
  #allocation1 [shape = 'u32[144,128]{1,0:T(1,128)}', space=vmem, size = 0x12000, scoped, tag = 'internal scratch']
  %s0 = inlined_call_operand.vmem [shape: f32[1,60], index: 0, kind: input, shape index: {}]
  %s1 = inlined_call_operand.vmem [shape: f32[128,3], index: 1, kind: input, shape index: {}]
  %s2 = inlined_call_operand.vmem [shape: f32[128,360], index: 2, kind: output, shape index: {}]
  %s3 = sld [smem:[#allocation0]]
  $region41: #{tpu_custom_call.1} parent=0
    _
  %s5 = ssub.s32 1, %s3
  %s6 = scalar_select 0, %s5, %s3
  loop: start=0, step=1, limit=10
  $region2: #{tpu_custom_call.1} parent=0 // loop_pre_header
    _
  $region3: #{tpu_custom_call.1} parent=0 // loop_header
    %s8 = sphi 0, %s12
    %p9 = scmp.ge.s32.totalorder %s8, 10
    %s16 = sphi 0, %s16
    %s18 = sphi 0, %s16
    %s19 = sphi 0, %s18
    %s33 = sphi 0, %s19
    %s39 = sphi 0, %s41
    %s42 = sphi 0, %s39
    %s43 = sphi 0, %s42
    %s59 = sphi 0, %s43
    %s65 = sphi 0, %s67
    %s68 = sphi 0, %s65
    %s69 = sphi 0, %s68
    %s85 = sphi 0, %s69
  $region4: #{tpu_custom_call.1} parent=0 // loop_header_branch
    %11 = sbr.rel (%p9) target = $region8
  $region5: #{tpu_custom_call.1} parent=0 // loop_body
    %s13 = ssub.s32 %s8, 1
    %s14 = ssub.s32 %s8, 2
    %s15 = sadd.s32 %s8, 1
    %s17 = sadd.s32 %s16, 1
    %p20 = scmp.eq.s32.totalorder %s8, 7
    %p21 = scmp.ne.s32.totalorder %s16, %s18
    %p22 = scmp.eq.s32.totalorder %s8, 0
    %p23 = por %p21, %p22
    %p24 = scmp.ne.s32.totalorder %s16, %s18
    %p25 = scmp.eq.s32.totalorder %s13, 7
    %p26 = por %p24, %p25
    %p27 = scmp.ne.s32.totalorder %s18, %s19
    %p28 = scmp.eq.s32.totalorder %s13, 0
    %p29 = por %p27, %p28
    %p30 = scmp.ne.s32.totalorder %s18, %s19
    %p31 = scmp.eq.s32.totalorder %s14, 7
    %p32 = por %p30, %p31
    %p34 = scmp.ne.s32.totalorder %s19, %s33
    %p35 = scmp.eq.s32.totalorder %s14, 0
    %p36 = por %p34, %p35
    %s37 = ssub.s32 %s8, %s15
    %p38 = scmp.eq.s32.totalorder %s37, 0
    %s40 = sadd.s32 %s39, 1
    %s41 = scalar_select %p38, %s39, %s40
    %p44 = pneg %p38
    %p45 = scmp.eq.s32.totalorder %s8, 7
    %p46 = por %p44, %p45
    %p47 = scmp.ne.s32.totalorder %s39, %s42
    %p48 = scmp.eq.s32.totalorder %s8, 0
    %p49 = por %p47, %p48
    %p50 = scmp.ne.s32.totalorder %s39, %s42
    %p51 = scmp.eq.s32.totalorder %s13, 7
    %p52 = por %p50, %p51
    %p53 = scmp.ne.s32.totalorder %s42, %s43
    %p54 = scmp.eq.s32.totalorder %s13, 0
    %p55 = por %p53, %p54
    %p56 = scmp.ne.s32.totalorder %s42, %s43
    %p57 = scmp.eq.s32.totalorder %s14, 7
    %p58 = por %p56, %p57
    %p60 = scmp.ne.s32.totalorder %s43, %s59
    %p61 = scmp.eq.s32.totalorder %s14, 0
    %p62 = por %p60, %p61
    %s63 = ssub.s32 %s8, %s15
    %p64 = scmp.eq.s32.totalorder %s63, 0
    %s66 = sadd.s32 %s65, 1
    %s67 = scalar_select %p64, %s65, %s66
    %p70 = pneg %p64
    %p71 = scmp.eq.s32.totalorder %s8, 7
    %p72 = por %p70, %p71
    %p73 = scmp.ne.s32.totalorder %s65, %s68
    %p74 = scmp.eq.s32.totalorder %s8, 0
    %p75 = por %p73, %p74
    %p76 = scmp.ne.s32.totalorder %s65, %s68
    %p77 = scmp.eq.s32.totalorder %s13, 7
    %p78 = por %p76, %p77
    %p79 = scmp.ne.s32.totalorder %s68, %s69
    %p80 = scmp.eq.s32.totalorder %s13, 0
    %p81 = por %p79, %p80
    %p82 = scmp.ne.s32.totalorder %s68, %s69
    %p83 = scmp.eq.s32.totalorder %s14, 7
    %p84 = por %p82, %p83
    %p86 = scmp.ne.s32.totalorder %s69, %s85
    %p87 = scmp.eq.s32.totalorder %s14, 0
    %p88 = por %p86, %p87
    %p89 = scmp.le.s32.totalorder 1, %s8
    %p90 = scmp.lt.s32.totalorder %s8, 9
    %p91 = pnand %p89, %p90
    %p92 = pneg %p91
    // Predicated region
    $region9: #{tpu_custom_call.1} parent=5 // pred_check
      _
    $region10: #{tpu_custom_call.1} parent=5 // pred_check_branch
      %94 = sbr.rel (%p91) target = $region12
    $region11: #{tpu_custom_call.1} parent=5 // pred_region
      %s95 = ssub.s32 %s8, 1
      // Predicated region
      $region13: #{tpu_custom_call.1} parent=11 // pred_check
        %p96 = pneg %p29
      $region14: #{tpu_custom_call.1} parent=11 // pred_check_branch
        %98 = sbr.rel (%p96) target = $region16
      $region15: #{tpu_custom_call.1} parent=11 // pred_region
        _
      $region16: #{tpu_custom_call.1} parent=11 // pred_fallthru
        _
    $region12: #{tpu_custom_call.1} parent=5 // pred_fallthru
      _
    %p99 = scmp.lt.s32.totalorder %s8, 8
    // Predicated region
    $region17: #{tpu_custom_call.1} parent=5 // pred_check
      %p100 = pneg %p99
    $region18: #{tpu_custom_call.1} parent=5 // pred_check_branch
      %102 = sbr.rel (%p100) target = $region20
    $region19: #{tpu_custom_call.1} parent=5 // pred_region
      // Predicated region
      $region21: #{tpu_custom_call.1} parent=19 // pred_check
        %p103 = pneg %p49
      $region22: #{tpu_custom_call.1} parent=19 // pred_check_branch
        %105 = sbr.rel (%p103) target = $region24
      $region23: #{tpu_custom_call.1} parent=19 // pred_region
        %s106 = smul.u32 2, %s8
        %p107 = scmp.lt.s32.totalorder %s106, 15
        %s108 = scalar_select %p107, %s106, 15
        %s109 = smul.addr %s108, 8
        %s110 = scalar_lea.vmem %s1, %s109
        %s111 = smul.u32 2, %s8
      $region24: #{tpu_custom_call.1} parent=19 // pred_fallthru
        _
    $region20: #{tpu_custom_call.1} parent=5 // pred_fallthru
      _
    %p112 = scmp.le.s32.totalorder 1, %s8
    %p113 = scmp.lt.s32.totalorder %s8, 9
    %p114 = pnand %p112, %p113
    %p115 = pneg %p114
    // Predicated region
    $region25: #{tpu_custom_call.1} parent=5 // pred_check
      _
    $region26: #{tpu_custom_call.1} parent=5 // pred_check_branch
      %117 = sbr.rel (%p114) target = $region28
    $region27: #{tpu_custom_call.1} parent=5 // pred_region
      %s118 = ssub.s32 %s8, 1
      %p119 = pneg %p29
      %p120 = pneg %p26
      %s121 = smul.u32 2, %s13
      %p122 = scmp.lt.s32.totalorder %s121, 15
      %s123 = scalar_select %p122, %s121, 15
      %s124 = smul.addr %s123, 8
      %s125 = scalar_lea.vmem %s1, %s124
      %p126 = pneg %p55
      %p127 = pneg %p52
      %p128 = pneg %p81
      %p129 = pneg %p78
      %s130 = smul.u32 2, %s13
      %p131 = scmp.lt.s32.totalorder %s130, 15
      %s132 = scalar_select %p131, %s130, 15
      %s133 = smul.addr %s132, 3
      %s134 = smul.addr %s133, 8
      %s135 = scalar_lea.vmem %s2, %s134
      %s136 = smul.u32 2, %s13
      %p137 = scmp.lt.s32.totalorder %s136, 15
      %s138 = scalar_select %p137, %s136, 15
      %s139 = smul.addr %s138, 8
      %s140 = scalar_lea.vmem %s1, %s139
      %s141 = smul.u32 2, %s13
      %s142 = smul.u32 2, %s13
      %p143 = scmp.lt.s32.totalorder %s142, 15
      %s144 = scalar_select %p143, %s142, 15
      %s145 = smul.addr %s144, 3
      %s146 = smul.addr %s145, 8
      %s147 = scalar_lea.vmem %s2, %s146
      %s148 = smul.u32 2, %s13
      %v149 = vld [vmem:[%s0] sm:$0x1]
      %v150 = vld [vmem:[%s140] sm:$0xff]
      %v151 = vld [vmem:[%s140 + $0x8] sm:$0xff]
      %153 = vset.pattern.permute.xlu0 0
      %154 = vperm.xlu0 %153, %v150
      %v155 = vpop.permute.xlu0 %154
      %158 = vset.pattern.permute.xlu0 0
      %159 = vperm.xlu0 %158, %v151
      %v160 = vpop.permute.xlu0 %159
      %v163 = vlaneseq
      %v164 = vshrl.u32 %v163, 7
      %v165 = vsub.s32 0, %v164
      %v166 = vrot.slane %v149, %v165
      %v168 = vmul.f32 %v155, %v166
      %v169 = vmul.f32 %v160, %v166
      %v170 = vand.u32 2147483647, %v168
      %vm171 = vcmp.le.f32.partialorder %v170, 0.7853982
      %vm172 = vcmp.lt.s32.totalorder %v168, 0
      %v173 = vand.u32 %v168, 2139095040
      %v174 = vshrl.u32 %v173, 23
      %v175 = vsub.s32 %v174, 127
      %v176 = vand.u32 2147483647, %v168
      %v177 = vand.u32 %v176, 8388607
      %v178 = vor.u32 %v177, 8388608
      %v179 = vsub.s32 0, %v178
      %v180 = vadd.s32 %v175, 1
      %vm181 = vcmp.gt.s32.totalorder %v180, 0
      %v182 = vsel %vm181, %v180, 0
      %v183 = vshrl.u32 %v182, 5
      %v184 = vand.u32 %v182, 31
      %v185 = vsub.s32 32, %v184
      %v186 = vshrl.u32 683565275, %v185
      %v187 = vshll.u32 683565275, %v184
      %v188 = vshrl.u32 2475754826, %v185
      %v189 = vor.u32 %v187, %v188
      %v190 = vshll.u32 2475754826, %v184
      %v191 = vshrl.u32 2131351028, %v185
      %v192 = vor.u32 %v190, %v191
      %v193 = vshll.u32 2131351028, %v184
      %v194 = vshrl.u32 2102212464, %v185
      %v195 = vor.u32 %v193, %v194
      %v196 = vshll.u32 2102212464, %v184
      %v197 = vshrl.u32 920167782, %v185
      %v198 = vor.u32 %v196, %v197
      %v199 = vshll.u32 920167782, %v184
      %v200 = vshrl.u32 1326507024, %v185
      %v201 = vor.u32 %v199, %v200
      %vm202 = vcmp.lt.s32.totalorder %v183, 1
      %vm203 = vcmp.lt.s32.totalorder %v183, 2
      %vm204 = vcmp.lt.s32.totalorder %v183, 3
      %vm205 = vcmp.lt.s32.totalorder %v183, 4
      %v206 = vsel %vm202, %v186, %v189
      %v207 = vsel %vm205, %v195, 2102212464
      %v208 = vsel %vm204, %v192, %v207
      %v209 = vsel %vm203, %v206, %v208
      %v210 = vsel %vm202, %v189, %v192
      %v211 = vsel %vm205, %v198, 920167782
      %v212 = vsel %vm204, %v195, %v211
      %v213 = vsel %vm203, %v210, %v212
      %v214 = vsel %vm202, %v192, %v195
      %v215 = vsel %vm205, %v201, 1326507024
      %v216 = vsel %vm204, %v198, %v215
      %v217 = vsel %vm203, %v214, %v216
      %v218 = vshll.u32 %v178, 8
      %v219 = vmul.u32.u64.compose %v218, %v217
      %v220 = vextract.low.u32 %v219
      %v221 = vextract.high.u32 %v219
      %v222 = vmul.u32.u64.compose %v218, %v213
      %v223 = vextract.low.u32 %v222
      %v224 = vextract.high.u32 %v222
      %v225 = vmul.u32 %v218, %v209
      %v226 = vadd.s32 %v221, %v223
      %vm227 = vc.u32 %v221, %v223
      %v228 = vadd.s32 %v224, 1
      %v229 = vsel %vm227, %v228, %v224
      %v230 = vadd.s32 %v225, %v229
      %v231 = vadd.s32 %v230, 536870912
      %v232 = vshrl.u32 %v231, 30
      %v233 = vshll.u32 %v232, 30
      %v234 = vsub.s32 %v230, %v233
      %vm235 = vcmp.lt.s32.totalorder %v234, 0
      %v236 = vsub.s32 0, %v234
      %v237 = vsel %vm235, %v236, %v234
      %v238 = vclz %v237
      %v239 = vsub.s32 %v238, 2
      %vm240 = vcmp.gt.s32.totalorder 0, %v239
      %v241 = vsel %vm240, 0, %v239
      %v242 = vsub.s32 32, %v241
      %v243 = vshll.u32 %v234, %v241
      %v244 = vshrl.u32 %v226, %v242
      %v245 = vor.u32 %v243, %v244
      %v246 = vsub.s32 4294967266, %v241
      %v247 = vadd.s32 %v246, 127
      %v248 = vshll.u32 %v247, 23
      %v249 = vor.u32 4788187, %v248
      %v250 = vand.u32 2147483647, %v249
      %v252 = vcvt.s32.f32 %v245
      %v253 = vmul.f32 %v252, %v250
      %v254 = vxor.u32 %v253, 2147483648
      %v255 = vsel %vm172, %v254, %v253
      %v256 = vsub.s32 4, %v232
      %v257 = vsel %vm172, %v256, %v232
      %v258 = vsel %vm171, %v168, %v255
      %v259 = vsel %vm171, 0, %v257
      %v260 = vcosq.f32.pop %v258
      %v261 = vsinq.f32.pop %v258
      %vm262 = vweird.f32 %v168
      %v263 = vadd.s32 %v259, 3
      %v264 = vand.u32 %v263, 3
      %vm265 = vcmp.lt.s32.totalorder %v264, 2
      %vm266 = vcmp.eq.s32.totalorder %v264, 0
      %v267 = vxor.u32 %v261, 2147483648
      %v268 = vsel %vm266, %v260, %v267
      %vm269 = vcmp.eq.s32.totalorder %v264, 2
      %v270 = vxor.u32 %v260, 2147483648
      %v271 = vsel %vm269, %v270, %v261
      %v272 = vsel %vm265, %v268, %v271
      %v273 = vsel %vm262, nan, %v272
      %v274 = vand.u32 2147483647, %v169
      %vm275 = vcmp.le.f32.partialorder %v274, 0.7853982
      %vm276 = vcmp.lt.s32.totalorder %v169, 0
      %v277 = vand.u32 %v169, 2139095040
      %v278 = vshrl.u32 %v277, 23
      %v279 = vsub.s32 %v278, 127
      %v280 = vand.u32 2147483647, %v169
      %v281 = vand.u32 %v280, 8388607
      %v282 = vor.u32 %v281, 8388608
      %v283 = vsub.s32 0, %v282
      %v284 = vadd.s32 %v279, 1
      %vm285 = vcmp.gt.s32.totalorder %v284, 0
      %v286 = vsel %vm285, %v284, 0
      %v287 = vshrl.u32 %v286, 5
      %v288 = vand.u32 %v286, 31
      %v289 = vsub.s32 32, %v288
      %v290 = vshrl.u32 683565275, %v289
      %v291 = vshll.u32 683565275, %v288
      %v292 = vshrl.u32 2475754826, %v289
      %v293 = vor.u32 %v291, %v292
      %v294 = vshll.u32 2475754826, %v288
      %v295 = vshrl.u32 2131351028, %v289
      %v296 = vor.u32 %v294, %v295
      %v297 = vshll.u32 2131351028, %v288
      %v298 = vshrl.u32 2102212464, %v289
      %v299 = vor.u32 %v297, %v298
      %v300 = vshll.u32 2102212464, %v288
      %v301 = vshrl.u32 920167782, %v289
      %v302 = vor.u32 %v300, %v301
      %v303 = vshll.u32 920167782, %v288
      %v304 = vshrl.u32 1326507024, %v289
      %v305 = vor.u32 %v303, %v304
      %vm306 = vcmp.lt.s32.totalorder %v287, 1
      %vm307 = vcmp.lt.s32.totalorder %v287, 2
      %vm308 = vcmp.lt.s32.totalorder %v287, 3
      %vm309 = vcmp.lt.s32.totalorder %v287, 4
      %v310 = vsel %vm306, %v290, %v293
      %v311 = vsel %vm309, %v299, 2102212464
      %v312 = vsel %vm308, %v296, %v311
      %v313 = vsel %vm307, %v310, %v312
      %v314 = vsel %vm306, %v293, %v296
      %v315 = vsel %vm309, %v302, 920167782
      %v316 = vsel %vm308, %v299, %v315
      %v317 = vsel %vm307, %v314, %v316
      %v318 = vsel %vm306, %v296, %v299
      %v319 = vsel %vm309, %v305, 1326507024
      %v320 = vsel %vm308, %v302, %v319
      %v321 = vsel %vm307, %v318, %v320
      %v322 = vshll.u32 %v282, 8
      %v323 = vmul.u32.u64.compose %v322, %v321
      %v324 = vextract.low.u32 %v323
      %v325 = vextract.high.u32 %v323
      %v326 = vmul.u32.u64.compose %v322, %v317
      %v327 = vextract.low.u32 %v326
      %v328 = vextract.high.u32 %v326
      %v329 = vmul.u32 %v322, %v313
      %v330 = vadd.s32 %v325, %v327
      %vm331 = vc.u32 %v325, %v327
      %v332 = vadd.s32 %v328, 1
      %v333 = vsel %vm331, %v332, %v328
      %v334 = vadd.s32 %v329, %v333
      %v335 = vadd.s32 %v334, 536870912
      %v336 = vshrl.u32 %v335, 30
      %v337 = vshll.u32 %v336, 30
      %v338 = vsub.s32 %v334, %v337
      %vm339 = vcmp.lt.s32.totalorder %v338, 0
      %v340 = vsub.s32 0, %v338
      %v341 = vsel %vm339, %v340, %v338
      %v342 = vclz %v341
      %v343 = vsub.s32 %v342, 2
      %vm344 = vcmp.gt.s32.totalorder 0, %v343
      %v345 = vsel %vm344, 0, %v343
      %v346 = vsub.s32 32, %v345
      %v347 = vshll.u32 %v338, %v345
      %v348 = vshrl.u32 %v330, %v346
      %v349 = vor.u32 %v347, %v348
      %v350 = vsub.s32 4294967266, %v345
      %v351 = vadd.s32 %v350, 127
      %v352 = vshll.u32 %v351, 23
      %v353 = vor.u32 4788187, %v352
      %v354 = vand.u32 2147483647, %v353
      %v356 = vcvt.s32.f32 %v349
      %v357 = vmul.f32 %v356, %v354
      %v358 = vxor.u32 %v357, 2147483648
      %v359 = vsel %vm276, %v358, %v357
      %v360 = vsub.s32 4, %v336
      %v361 = vsel %vm276, %v360, %v336
      %v362 = vsel %vm275, %v169, %v359
      %v363 = vsel %vm275, 0, %v361
      %v364 = vcosq.f32.pop %v362
      %v365 = vsinq.f32.pop %v362
      %vm366 = vweird.f32 %v169
      %v367 = vadd.s32 %v363, 3
      %v368 = vand.u32 %v367, 3
      %vm369 = vcmp.lt.s32.totalorder %v368, 2
      %vm370 = vcmp.eq.s32.totalorder %v368, 0
      %v371 = vxor.u32 %v365, 2147483648
      %v372 = vsel %vm370, %v364, %v371
      %vm373 = vcmp.eq.s32.totalorder %v368, 2
      %v374 = vxor.u32 %v364, 2147483648
      %v375 = vsel %vm373, %v374, %v365
      %v376 = vsel %vm369, %v372, %v375
      %v377 = vsel %vm366, nan, %v376
      %v378 = vand.u32 2147483647, %v168
      %vm379 = vcmp.le.f32.partialorder %v378, 0.7853982
      %vm380 = vcmp.lt.s32.totalorder %v168, 0
      %v381 = vand.u32 %v168, 2139095040
      %v382 = vshrl.u32 %v381, 23
      %v383 = vsub.s32 %v382, 127
      %v384 = vand.u32 2147483647, %v168
      %v385 = vand.u32 %v384, 8388607
      %v386 = vor.u32 %v385, 8388608
      %v387 = vsub.s32 0, %v386
      %v388 = vadd.s32 %v383, 1
      %vm389 = vcmp.gt.s32.totalorder %v388, 0
      %v390 = vsel %vm389, %v388, 0
      %v391 = vshrl.u32 %v390, 5
      %v392 = vand.u32 %v390, 31
      %v393 = vsub.s32 32, %v392
      %v394 = vshrl.u32 683565275, %v393
      %v395 = vshll.u32 683565275, %v392
      %v396 = vshrl.u32 2475754826, %v393
      %v397 = vor.u32 %v395, %v396
      %v398 = vshll.u32 2475754826, %v392
      %v399 = vshrl.u32 2131351028, %v393
      %v400 = vor.u32 %v398, %v399
      %v401 = vshll.u32 2131351028, %v392
      %v402 = vshrl.u32 2102212464, %v393
      %v403 = vor.u32 %v401, %v402
      %v404 = vshll.u32 2102212464, %v392
      %v405 = vshrl.u32 920167782, %v393
      %v406 = vor.u32 %v404, %v405
      %v407 = vshll.u32 920167782, %v392
      %v408 = vshrl.u32 1326507024, %v393
      %v409 = vor.u32 %v407, %v408
      %vm410 = vcmp.lt.s32.totalorder %v391, 1
      %vm411 = vcmp.lt.s32.totalorder %v391, 2
      %vm412 = vcmp.lt.s32.totalorder %v391, 3
      %vm413 = vcmp.lt.s32.totalorder %v391, 4
      %v414 = vsel %vm410, %v394, %v397
      %v415 = vsel %vm413, %v403, 2102212464
      %v416 = vsel %vm412, %v400, %v415
      %v417 = vsel %vm411, %v414, %v416
      %v418 = vsel %vm410, %v397, %v400
      %v419 = vsel %vm413, %v406, 920167782
      %v420 = vsel %vm412, %v403, %v419
      %v421 = vsel %vm411, %v418, %v420
      %v422 = vsel %vm410, %v400, %v403
      %v423 = vsel %vm413, %v409, 1326507024
      %v424 = vsel %vm412, %v406, %v423
      %v425 = vsel %vm411, %v422, %v424
      %v426 = vshll.u32 %v386, 8
      %v427 = vmul.u32.u64.compose %v426, %v425
      %v428 = vextract.low.u32 %v427
      %v429 = vextract.high.u32 %v427
      %v430 = vmul.u32.u64.compose %v426, %v421
      %v431 = vextract.low.u32 %v430
      %v432 = vextract.high.u32 %v430
      %v433 = vmul.u32 %v426, %v417
      %v434 = vadd.s32 %v429, %v431
      %vm435 = vc.u32 %v429, %v431
      %v436 = vadd.s32 %v432, 1
      %v437 = vsel %vm435, %v436, %v432
      %v438 = vadd.s32 %v433, %v437
      %v439 = vadd.s32 %v438, 536870912
      %v440 = vshrl.u32 %v439, 30
      %v441 = vshll.u32 %v440, 30
      %v442 = vsub.s32 %v438, %v441
      %vm443 = vcmp.lt.s32.totalorder %v442, 0
      %v444 = vsub.s32 0, %v442
      %v445 = vsel %vm443, %v444, %v442
      %v446 = vclz %v445
      %v447 = vsub.s32 %v446, 2
      %vm448 = vcmp.gt.s32.totalorder 0, %v447
      %v449 = vsel %vm448, 0, %v447
      %v450 = vsub.s32 32, %v449
      %v451 = vshll.u32 %v442, %v449
      %v452 = vshrl.u32 %v434, %v450
      %v453 = vor.u32 %v451, %v452
      %v454 = vsub.s32 4294967266, %v449
      %v455 = vadd.s32 %v454, 127
      %v456 = vshll.u32 %v455, 23
      %v457 = vor.u32 4788187, %v456
      %v458 = vand.u32 2147483647, %v457
      %v460 = vcvt.s32.f32 %v453
      %v461 = vmul.f32 %v460, %v458
      %v462 = vxor.u32 %v461, 2147483648
      %v463 = vsel %vm380, %v462, %v461
      %v464 = vsub.s32 4, %v440
      %v465 = vsel %vm380, %v464, %v440
      %v466 = vsel %vm379, %v168, %v463
      %v467 = vsel %vm379, 0, %v465
      %v468 = vcosq.f32.pop %v466
      %v469 = vsinq.f32.pop %v466
      %vm470 = vweird.f32 %v168
      %v471 = vand.u32 %v467, 3
      %vm472 = vcmp.lt.s32.totalorder %v471, 2
      %vm473 = vcmp.eq.s32.totalorder %v471, 0
      %v474 = vxor.u32 %v469, 2147483648
      %v475 = vsel %vm473, %v468, %v474
      %vm476 = vcmp.eq.s32.totalorder %v471, 2
      %v477 = vxor.u32 %v468, 2147483648
      %v478 = vsel %vm476, %v477, %v469
      %v479 = vsel %vm472, %v475, %v478
      %v480 = vsel %vm470, nan, %v479
      %v481 = vand.u32 2147483647, %v169
      %vm482 = vcmp.le.f32.partialorder %v481, 0.7853982
      %vm483 = vcmp.lt.s32.totalorder %v169, 0
      %v484 = vand.u32 %v169, 2139095040
      %v485 = vshrl.u32 %v484, 23
      %v486 = vsub.s32 %v485, 127
      %v487 = vand.u32 2147483647, %v169
      %v488 = vand.u32 %v487, 8388607
      %v489 = vor.u32 %v488, 8388608
      %v490 = vsub.s32 0, %v489
      %v491 = vadd.s32 %v486, 1
      %vm492 = vcmp.gt.s32.totalorder %v491, 0
      %v493 = vsel %vm492, %v491, 0
      %v494 = vshrl.u32 %v493, 5
      %v495 = vand.u32 %v493, 31
      %v496 = vsub.s32 32, %v495
      %v497 = vshrl.u32 683565275, %v496
      %v498 = vshll.u32 683565275, %v495
      %v499 = vshrl.u32 2475754826, %v496
      %v500 = vor.u32 %v498, %v499
      %v501 = vshll.u32 2475754826, %v495
      %v502 = vshrl.u32 2131351028, %v496
      %v503 = vor.u32 %v501, %v502
      %v504 = vshll.u32 2131351028, %v495
      %v505 = vshrl.u32 2102212464, %v496
      %v506 = vor.u32 %v504, %v505
      %v507 = vshll.u32 2102212464, %v495
      %v508 = vshrl.u32 920167782, %v496
      %v509 = vor.u32 %v507, %v508
      %v510 = vshll.u32 920167782, %v495
      %v511 = vshrl.u32 1326507024, %v496
      %v512 = vor.u32 %v510, %v511
      %vm513 = vcmp.lt.s32.totalorder %v494, 1
      %vm514 = vcmp.lt.s32.totalorder %v494, 2
      %vm515 = vcmp.lt.s32.totalorder %v494, 3
      %vm516 = vcmp.lt.s32.totalorder %v494, 4
      %v517 = vsel %vm513, %v497, %v500
      %v518 = vsel %vm516, %v506, 2102212464
      %v519 = vsel %vm515, %v503, %v518
      %v520 = vsel %vm514, %v517, %v519
      %v521 = vsel %vm513, %v500, %v503
      %v522 = vsel %vm516, %v509, 920167782
      %v523 = vsel %vm515, %v506, %v522
      %v524 = vsel %vm514, %v521, %v523
      %v525 = vsel %vm513, %v503, %v506
      %v526 = vsel %vm516, %v512, 1326507024
      %v527 = vsel %vm515, %v509, %v526
      %v528 = vsel %vm514, %v525, %v527
      %v529 = vshll.u32 %v489, 8
      %v530 = vmul.u32.u64.compose %v529, %v528
      %v531 = vextract.low.u32 %v530
      %v532 = vextract.high.u32 %v530
      %v533 = vmul.u32.u64.compose %v529, %v524
      %v534 = vextract.low.u32 %v533
      %v535 = vextract.high.u32 %v533
      %v536 = vmul.u32 %v529, %v520
      %v537 = vadd.s32 %v532, %v534
      %vm538 = vc.u32 %v532, %v534
      %v539 = vadd.s32 %v535, 1
      %v540 = vsel %vm538, %v539, %v535
      %v541 = vadd.s32 %v536, %v540
      %v542 = vadd.s32 %v541, 536870912
      %v543 = vshrl.u32 %v542, 30
      %v544 = vshll.u32 %v543, 30
      %v545 = vsub.s32 %v541, %v544
      %vm546 = vcmp.lt.s32.totalorder %v545, 0
      %v547 = vsub.s32 0, %v545
      %v548 = vsel %vm546, %v547, %v545
      %v549 = vclz %v548
      %v550 = vsub.s32 %v549, 2
      %vm551 = vcmp.gt.s32.totalorder 0, %v550
      %v552 = vsel %vm551, 0, %v550
      %v553 = vsub.s32 32, %v552
      %v554 = vshll.u32 %v545, %v552
      %v555 = vshrl.u32 %v537, %v553
      %v556 = vor.u32 %v554, %v555
      %v557 = vsub.s32 4294967266, %v552
      %v558 = vadd.s32 %v557, 127
      %v559 = vshll.u32 %v558, 23
      %v560 = vor.u32 4788187, %v559
      %v561 = vand.u32 2147483647, %v560
      %v563 = vcvt.s32.f32 %v556
      %v564 = vmul.f32 %v563, %v561
      %v565 = vxor.u32 %v564, 2147483648
      %v566 = vsel %vm483, %v565, %v564
      %v567 = vsub.s32 4, %v543
      %v568 = vsel %vm483, %v567, %v543
      %v569 = vsel %vm482, %v169, %v566
      %v570 = vsel %vm482, 0, %v568
      %v571 = vcosq.f32.pop %v569
      %v572 = vsinq.f32.pop %v569
      %vm573 = vweird.f32 %v169
      %v574 = vand.u32 %v570, 3
      %vm575 = vcmp.lt.s32.totalorder %v574, 2
      %vm576 = vcmp.eq.s32.totalorder %v574, 0
      %v577 = vxor.u32 %v572, 2147483648
      %v578 = vsel %vm576, %v571, %v577
      %vm579 = vcmp.eq.s32.totalorder %v574, 2
      %v580 = vxor.u32 %v571, 2147483648
      %v581 = vsel %vm579, %v580, %v572
      %v582 = vsel %vm575, %v578, %v581
      %v583 = vsel %vm573, nan, %v582
      %584 = vset.pattern.permute.xlu0 1
      %585 = vperm.xlu0 %584, %v150
      %v586 = vpop.permute.xlu0 %585
      %588 = vset.pattern.permute.xlu0 1
      %589 = vperm.xlu0 %588, %v151
      %v590 = vpop.permute.xlu0 %589
      %v592 = vmul.f32 %v586, %v166
      %v593 = vmul.f32 %v590, %v166
      %v594 = vand.u32 2147483647, %v592
      %vm595 = vcmp.le.f32.partialorder %v594, 0.7853982
      %vm596 = vcmp.lt.s32.totalorder %v592, 0
      %v597 = vand.u32 %v592, 2139095040
      %v598 = vshrl.u32 %v597, 23
      %v599 = vsub.s32 %v598, 127
      %v600 = vand.u32 2147483647, %v592
      %v601 = vand.u32 %v600, 8388607
      %v602 = vor.u32 %v601, 8388608
      %v603 = vsub.s32 0, %v602
      %v604 = vadd.s32 %v599, 1
      %vm605 = vcmp.gt.s32.totalorder %v604, 0
      %v606 = vsel %vm605, %v604, 0
      %v607 = vshrl.u32 %v606, 5
      %v608 = vand.u32 %v606, 31
      %v609 = vsub.s32 32, %v608
      %v610 = vshrl.u32 683565275, %v609
      %v611 = vshll.u32 683565275, %v608
      %v612 = vshrl.u32 2475754826, %v609
      %v613 = vor.u32 %v611, %v612
      %v614 = vshll.u32 2475754826, %v608
      %v615 = vshrl.u32 2131351028, %v609
      %v616 = vor.u32 %v614, %v615
      %v617 = vshll.u32 2131351028, %v608
      %v618 = vshrl.u32 2102212464, %v609
      %v619 = vor.u32 %v617, %v618
      %v620 = vshll.u32 2102212464, %v608
      %v621 = vshrl.u32 920167782, %v609
      %v622 = vor.u32 %v620, %v621
      %v623 = vshll.u32 920167782, %v608
      %v624 = vshrl.u32 1326507024, %v609
      %v625 = vor.u32 %v623, %v624
      %vm626 = vcmp.lt.s32.totalorder %v607, 1
      %vm627 = vcmp.lt.s32.totalorder %v607, 2
      %vm628 = vcmp.lt.s32.totalorder %v607, 3
      %vm629 = vcmp.lt.s32.totalorder %v607, 4
      %v630 = vsel %vm626, %v610, %v613
      %v631 = vsel %vm629, %v619, 2102212464
      %v632 = vsel %vm628, %v616, %v631
      %v633 = vsel %vm627, %v630, %v632
      %v634 = vsel %vm626, %v613, %v616
      %v635 = vsel %vm629, %v622, 920167782
      %v636 = vsel %vm628, %v619, %v635
      %v637 = vsel %vm627, %v634, %v636
      %v638 = vsel %vm626, %v616, %v619
      %v639 = vsel %vm629, %v625, 1326507024
      %v640 = vsel %vm628, %v622, %v639
      %v641 = vsel %vm627, %v638, %v640
      %v642 = vshll.u32 %v602, 8
      %v643 = vmul.u32.u64.compose %v642, %v641
      %v644 = vextract.low.u32 %v643
      %v645 = vextract.high.u32 %v643
      %v646 = vmul.u32.u64.compose %v642, %v637
      %v647 = vextract.low.u32 %v646
      %v648 = vextract.high.u32 %v646
      %v649 = vmul.u32 %v642, %v633
      %v650 = vadd.s32 %v645, %v647
      %vm651 = vc.u32 %v645, %v647
      %v652 = vadd.s32 %v648, 1
      %v653 = vsel %vm651, %v652, %v648
      %v654 = vadd.s32 %v649, %v653
      %v655 = vadd.s32 %v654, 536870912
      %v656 = vshrl.u32 %v655, 30
      %v657 = vshll.u32 %v656, 30
      %v658 = vsub.s32 %v654, %v657
      %vm659 = vcmp.lt.s32.totalorder %v658, 0
      %v660 = vsub.s32 0, %v658
      %v661 = vsel %vm659, %v660, %v658
      %v662 = vclz %v661
      %v663 = vsub.s32 %v662, 2
      %vm664 = vcmp.gt.s32.totalorder 0, %v663
      %v665 = vsel %vm664, 0, %v663
      %v666 = vsub.s32 32, %v665
      %v667 = vshll.u32 %v658, %v665
      %v668 = vshrl.u32 %v650, %v666
      %v669 = vor.u32 %v667, %v668
      %v670 = vsub.s32 4294967266, %v665
      %v671 = vadd.s32 %v670, 127
      %v672 = vshll.u32 %v671, 23
      %v673 = vor.u32 4788187, %v672
      %v674 = vand.u32 2147483647, %v673
      %v676 = vcvt.s32.f32 %v669
      %v677 = vmul.f32 %v676, %v674
      %v678 = vxor.u32 %v677, 2147483648
      %v679 = vsel %vm596, %v678, %v677
      %v680 = vsub.s32 4, %v656
      %v681 = vsel %vm596, %v680, %v656
      %v682 = vsel %vm595, %v592, %v679
      %v683 = vsel %vm595, 0, %v681
      %v684 = vcosq.f32.pop %v682
      %v685 = vsinq.f32.pop %v682
      %vm686 = vweird.f32 %v592
      %v687 = vadd.s32 %v683, 3
      %v688 = vand.u32 %v687, 3
      %vm689 = vcmp.lt.s32.totalorder %v688, 2
      %vm690 = vcmp.eq.s32.totalorder %v688, 0
      %v691 = vxor.u32 %v685, 2147483648
      %v692 = vsel %vm690, %v684, %v691
      %vm693 = vcmp.eq.s32.totalorder %v688, 2
      %v694 = vxor.u32 %v684, 2147483648
      %v695 = vsel %vm693, %v694, %v685
      %v696 = vsel %vm689, %v692, %v695
      %v697 = vsel %vm686, nan, %v696
      %v698 = vand.u32 2147483647, %v593
      %vm699 = vcmp.le.f32.partialorder %v698, 0.7853982
      %vm700 = vcmp.lt.s32.totalorder %v593, 0
      %v701 = vand.u32 %v593, 2139095040
      %v702 = vshrl.u32 %v701, 23
      %v703 = vsub.s32 %v702, 127
      %v704 = vand.u32 2147483647, %v593
      %v705 = vand.u32 %v704, 8388607
      %v706 = vor.u32 %v705, 8388608
      %v707 = vsub.s32 0, %v706
      %v708 = vadd.s32 %v703, 1
      %vm709 = vcmp.gt.s32.totalorder %v708, 0
      %v710 = vsel %vm709, %v708, 0
      %v711 = vshrl.u32 %v710, 5
      %v712 = vand.u32 %v710, 31
      %v713 = vsub.s32 32, %v712
      %v714 = vshrl.u32 683565275, %v713
      %v715 = vshll.u32 683565275, %v712
      %v716 = vshrl.u32 2475754826, %v713
      %v717 = vor.u32 %v715, %v716
      %v718 = vshll.u32 2475754826, %v712
      %v719 = vshrl.u32 2131351028, %v713
      %v720 = vor.u32 %v718, %v719
      %v721 = vshll.u32 2131351028, %v712
      %v722 = vshrl.u32 2102212464, %v713
      %v723 = vor.u32 %v721, %v722
      %v724 = vshll.u32 2102212464, %v712
      %v725 = vshrl.u32 920167782, %v713
      %v726 = vor.u32 %v724, %v725
      %v727 = vshll.u32 920167782, %v712
      %v728 = vshrl.u32 1326507024, %v713
      %v729 = vor.u32 %v727, %v728
      %vm730 = vcmp.lt.s32.totalorder %v711, 1
      %vm731 = vcmp.lt.s32.totalorder %v711, 2
      %vm732 = vcmp.lt.s32.totalorder %v711, 3
      %vm733 = vcmp.lt.s32.totalorder %v711, 4
      %v734 = vsel %vm730, %v714, %v717
      %v735 = vsel %vm733, %v723, 2102212464
      %v736 = vsel %vm732, %v720, %v735
      %v737 = vsel %vm731, %v734, %v736
      %v738 = vsel %vm730, %v717, %v720
      %v739 = vsel %vm733, %v726, 920167782
      %v740 = vsel %vm732, %v723, %v739
      %v741 = vsel %vm731, %v738, %v740
      %v742 = vsel %vm730, %v720, %v723
      %v743 = vsel %vm733, %v729, 1326507024
      %v744 = vsel %vm732, %v726, %v743
      %v745 = vsel %vm731, %v742, %v744
      %v746 = vshll.u32 %v706, 8
      %v747 = vmul.u32.u64.compose %v746, %v745
      %v748 = vextract.low.u32 %v747
      %v749 = vextract.high.u32 %v747
      %v750 = vmul.u32.u64.compose %v746, %v741
      %v751 = vextract.low.u32 %v750
      %v752 = vextract.high.u32 %v750
      %v753 = vmul.u32 %v746, %v737
      %v754 = vadd.s32 %v749, %v751
      %vm755 = vc.u32 %v749, %v751
      %v756 = vadd.s32 %v752, 1
      %v757 = vsel %vm755, %v756, %v752
      %v758 = vadd.s32 %v753, %v757
      %v759 = vadd.s32 %v758, 536870912
      %v760 = vshrl.u32 %v759, 30
      %v761 = vshll.u32 %v760, 30
      %v762 = vsub.s32 %v758, %v761
      %vm763 = vcmp.lt.s32.totalorder %v762, 0
      %v764 = vsub.s32 0, %v762
      %v765 = vsel %vm763, %v764, %v762
      %v766 = vclz %v765
      %v767 = vsub.s32 %v766, 2
      %vm768 = vcmp.gt.s32.totalorder 0, %v767
      %v769 = vsel %vm768, 0, %v767
      %v770 = vsub.s32 32, %v769
      %v771 = vshll.u32 %v762, %v769
      %v772 = vshrl.u32 %v754, %v770
      %v773 = vor.u32 %v771, %v772
      %v774 = vsub.s32 4294967266, %v769
      %v775 = vadd.s32 %v774, 127
      %v776 = vshll.u32 %v775, 23
      %v777 = vor.u32 4788187, %v776
      %v778 = vand.u32 2147483647, %v777
      %v780 = vcvt.s32.f32 %v773
      %v781 = vmul.f32 %v780, %v778
      %v782 = vxor.u32 %v781, 2147483648
      %v783 = vsel %vm700, %v782, %v781
      %v784 = vsub.s32 4, %v760
      %v785 = vsel %vm700, %v784, %v760
      %v786 = vsel %vm699, %v593, %v783
      %v787 = vsel %vm699, 0, %v785
      %v788 = vcosq.f32.pop %v786
      %v789 = vsinq.f32.pop %v786
      %vm790 = vweird.f32 %v593
      %v791 = vadd.s32 %v787, 3
      %v792 = vand.u32 %v791, 3
      %vm793 = vcmp.lt.s32.totalorder %v792, 2
      %vm794 = vcmp.eq.s32.totalorder %v792, 0
      %v795 = vxor.u32 %v789, 2147483648
      %v796 = vsel %vm794, %v788, %v795
      %vm797 = vcmp.eq.s32.totalorder %v792, 2
      %v798 = vxor.u32 %v788, 2147483648
      %v799 = vsel %vm797, %v798, %v789
      %v800 = vsel %vm793, %v796, %v799
      %v801 = vsel %vm790, nan, %v800
      %v802 = vand.u32 2147483647, %v592
      %vm803 = vcmp.le.f32.partialorder %v802, 0.7853982
      %vm804 = vcmp.lt.s32.totalorder %v592, 0
      %v805 = vand.u32 %v592, 2139095040
      %v806 = vshrl.u32 %v805, 23
      %v807 = vsub.s32 %v806, 127
      %v808 = vand.u32 2147483647, %v592
      %v809 = vand.u32 %v808, 8388607
      %v810 = vor.u32 %v809, 8388608
      %v811 = vsub.s32 0, %v810
      %v812 = vadd.s32 %v807, 1
      %vm813 = vcmp.gt.s32.totalorder %v812, 0
      %v814 = vsel %vm813, %v812, 0
      %v815 = vshrl.u32 %v814, 5
      %v816 = vand.u32 %v814, 31
      %v817 = vsub.s32 32, %v816
      %v818 = vshrl.u32 683565275, %v817
      %v819 = vshll.u32 683565275, %v816
      %v820 = vshrl.u32 2475754826, %v817
      %v821 = vor.u32 %v819, %v820
      %v822 = vshll.u32 2475754826, %v816
      %v823 = vshrl.u32 2131351028, %v817
      %v824 = vor.u32 %v822, %v823
      %v825 = vshll.u32 2131351028, %v816
      %v826 = vshrl.u32 2102212464, %v817
      %v827 = vor.u32 %v825, %v826
      %v828 = vshll.u32 2102212464, %v816
      %v829 = vshrl.u32 920167782, %v817
      %v830 = vor.u32 %v828, %v829
      %v831 = vshll.u32 920167782, %v816
      %v832 = vshrl.u32 1326507024, %v817
      %v833 = vor.u32 %v831, %v832
      %vm834 = vcmp.lt.s32.totalorder %v815, 1
      %vm835 = vcmp.lt.s32.totalorder %v815, 2
      %vm836 = vcmp.lt.s32.totalorder %v815, 3
      %vm837 = vcmp.lt.s32.totalorder %v815, 4
      %v838 = vsel %vm834, %v818, %v821
      %v839 = vsel %vm837, %v827, 2102212464
      %v840 = vsel %vm836, %v824, %v839
      %v841 = vsel %vm835, %v838, %v840
      %v842 = vsel %vm834, %v821, %v824
      %v843 = vsel %vm837, %v830, 920167782
      %v844 = vsel %vm836, %v827, %v843
      %v845 = vsel %vm835, %v842, %v844
      %v846 = vsel %vm834, %v824, %v827
      %v847 = vsel %vm837, %v833, 1326507024
      %v848 = vsel %vm836, %v830, %v847
      %v849 = vsel %vm835, %v846, %v848
      %v850 = vshll.u32 %v810, 8
      %v851 = vmul.u32.u64.compose %v850, %v849
      %v852 = vextract.low.u32 %v851
      %v853 = vextract.high.u32 %v851
      %v854 = vmul.u32.u64.compose %v850, %v845
      %v855 = vextract.low.u32 %v854
      %v856 = vextract.high.u32 %v854
      %v857 = vmul.u32 %v850, %v841
      %v858 = vadd.s32 %v853, %v855
      %vm859 = vc.u32 %v853, %v855
      %v860 = vadd.s32 %v856, 1
      %v861 = vsel %vm859, %v860, %v856
      %v862 = vadd.s32 %v857, %v861
      %v863 = vadd.s32 %v862, 536870912
      %v864 = vshrl.u32 %v863, 30
      %v865 = vshll.u32 %v864, 30
      %v866 = vsub.s32 %v862, %v865
      %vm867 = vcmp.lt.s32.totalorder %v866, 0
      %v868 = vsub.s32 0, %v866
      %v869 = vsel %vm867, %v868, %v866
      %v870 = vclz %v869
      %v871 = vsub.s32 %v870, 2
      %vm872 = vcmp.gt.s32.totalorder 0, %v871
      %v873 = vsel %vm872, 0, %v871
      %v874 = vsub.s32 32, %v873
      %v875 = vshll.u32 %v866, %v873
      %v876 = vshrl.u32 %v858, %v874
      %v877 = vor.u32 %v875, %v876
      %v878 = vsub.s32 4294967266, %v873
      %v879 = vadd.s32 %v878, 127
      %v880 = vshll.u32 %v879, 23
      %v881 = vor.u32 4788187, %v880
      %v882 = vand.u32 2147483647, %v881
      %v884 = vcvt.s32.f32 %v877
      %v885 = vmul.f32 %v884, %v882
      %v886 = vxor.u32 %v885, 2147483648
      %v887 = vsel %vm804, %v886, %v885
      %v888 = vsub.s32 4, %v864
      %v889 = vsel %vm804, %v888, %v864
      %v890 = vsel %vm803, %v592, %v887
      %v891 = vsel %vm803, 0, %v889
      %v892 = vcosq.f32.pop %v890
      %v893 = vsinq.f32.pop %v890
      %vm894 = vweird.f32 %v592
      %v895 = vand.u32 %v891, 3
      %vm896 = vcmp.lt.s32.totalorder %v895, 2
      %vm897 = vcmp.eq.s32.totalorder %v895, 0
      %v898 = vxor.u32 %v893, 2147483648
      %v899 = vsel %vm897, %v892, %v898
      %vm900 = vcmp.eq.s32.totalorder %v895, 2
      %v901 = vxor.u32 %v892, 2147483648
      %v902 = vsel %vm900, %v901, %v893
      %v903 = vsel %vm896, %v899, %v902
      %v904 = vsel %vm894, nan, %v903
      %v905 = vand.u32 2147483647, %v593
      %vm906 = vcmp.le.f32.partialorder %v905, 0.7853982
      %vm907 = vcmp.lt.s32.totalorder %v593, 0
      %v908 = vand.u32 %v593, 2139095040
      %v909 = vshrl.u32 %v908, 23
      %v910 = vsub.s32 %v909, 127
      %v911 = vand.u32 2147483647, %v593
      %v912 = vand.u32 %v911, 8388607
      %v913 = vor.u32 %v912, 8388608
      %v914 = vsub.s32 0, %v913
      %v915 = vadd.s32 %v910, 1
      %vm916 = vcmp.gt.s32.totalorder %v915, 0
      %v917 = vsel %vm916, %v915, 0
      %v918 = vshrl.u32 %v917, 5
      %v919 = vand.u32 %v917, 31
      %v920 = vsub.s32 32, %v919
      %v921 = vshrl.u32 683565275, %v920
      %v922 = vshll.u32 683565275, %v919
      %v923 = vshrl.u32 2475754826, %v920
      %v924 = vor.u32 %v922, %v923
      %v925 = vshll.u32 2475754826, %v919
      %v926 = vshrl.u32 2131351028, %v920
      %v927 = vor.u32 %v925, %v926
      %v928 = vshll.u32 2131351028, %v919
      %v929 = vshrl.u32 2102212464, %v920
      %v930 = vor.u32 %v928, %v929
      %v931 = vshll.u32 2102212464, %v919
      %v932 = vshrl.u32 920167782, %v920
      %v933 = vor.u32 %v931, %v932
      %v934 = vshll.u32 920167782, %v919
      %v935 = vshrl.u32 1326507024, %v920
      %v936 = vor.u32 %v934, %v935
      %vm937 = vcmp.lt.s32.totalorder %v918, 1
      %vm938 = vcmp.lt.s32.totalorder %v918, 2
      %vm939 = vcmp.lt.s32.totalorder %v918, 3
      %vm940 = vcmp.lt.s32.totalorder %v918, 4
      %v941 = vsel %vm937, %v921, %v924
      %v942 = vsel %vm940, %v930, 2102212464
      %v943 = vsel %vm939, %v927, %v942
      %v944 = vsel %vm938, %v941, %v943
      %v945 = vsel %vm937, %v924, %v927
      %v946 = vsel %vm940, %v933, 920167782
      %v947 = vsel %vm939, %v930, %v946
      %v948 = vsel %vm938, %v945, %v947
      %v949 = vsel %vm937, %v927, %v930
      %v950 = vsel %vm940, %v936, 1326507024
      %v951 = vsel %vm939, %v933, %v950
      %v952 = vsel %vm938, %v949, %v951
      %v953 = vshll.u32 %v913, 8
      %v954 = vmul.u32.u64.compose %v953, %v952
      %v955 = vextract.low.u32 %v954
      %v956 = vextract.high.u32 %v954
      %v957 = vmul.u32.u64.compose %v953, %v948
      %v958 = vextract.low.u32 %v957
      %v959 = vextract.high.u32 %v957
      %v960 = vmul.u32 %v953, %v944
      %v961 = vadd.s32 %v956, %v958
      %vm962 = vc.u32 %v956, %v958
      %v963 = vadd.s32 %v959, 1
      %v964 = vsel %vm962, %v963, %v959
      %v965 = vadd.s32 %v960, %v964
      %v966 = vadd.s32 %v965, 536870912
      %v967 = vshrl.u32 %v966, 30
      %v968 = vshll.u32 %v967, 30
      %v969 = vsub.s32 %v965, %v968
      %vm970 = vcmp.lt.s32.totalorder %v969, 0
      %v971 = vsub.s32 0, %v969
      %v972 = vsel %vm970, %v971, %v969
      %v973 = vclz %v972
      %v974 = vsub.s32 %v973, 2
      %vm975 = vcmp.gt.s32.totalorder 0, %v974
      %v976 = vsel %vm975, 0, %v974
      %v977 = vsub.s32 32, %v976
      %v978 = vshll.u32 %v969, %v976
      %v979 = vshrl.u32 %v961, %v977
      %v980 = vor.u32 %v978, %v979
      %v981 = vsub.s32 4294967266, %v976
      %v982 = vadd.s32 %v981, 127
      %v983 = vshll.u32 %v982, 23
      %v984 = vor.u32 4788187, %v983
      %v985 = vand.u32 2147483647, %v984
      %v987 = vcvt.s32.f32 %v980
      %v988 = vmul.f32 %v987, %v985
      %v989 = vxor.u32 %v988, 2147483648
      %v990 = vsel %vm907, %v989, %v988
      %v991 = vsub.s32 4, %v967
      %v992 = vsel %vm907, %v991, %v967
      %v993 = vsel %vm906, %v593, %v990
      %v994 = vsel %vm906, 0, %v992
      %v995 = vcosq.f32.pop %v993
      %v996 = vsinq.f32.pop %v993
      %vm997 = vweird.f32 %v593
      %v998 = vand.u32 %v994, 3
      %vm999 = vcmp.lt.s32.totalorder %v998, 2
      %vm1000 = vcmp.eq.s32.totalorder %v998, 0
      %v1001 = vxor.u32 %v996, 2147483648
      %v1002 = vsel %vm1000, %v995, %v1001
      %vm1003 = vcmp.eq.s32.totalorder %v998, 2
      %v1004 = vxor.u32 %v995, 2147483648
      %v1005 = vsel %vm1003, %v1004, %v996
      %v1006 = vsel %vm999, %v1002, %v1005
      %v1007 = vsel %vm997, nan, %v1006
      %1008 = vset.pattern.permute.xlu0 2
      %1009 = vperm.xlu0 %1008, %v150
      %v1010 = vpop.permute.xlu0 %1009
      %1012 = vset.pattern.permute.xlu0 2
      %1013 = vperm.xlu0 %1012, %v151
      %v1014 = vpop.permute.xlu0 %1013
      %v1016 = vmul.f32 %v1010, %v166
      %v1017 = vmul.f32 %v1014, %v166
      %v1018 = vand.u32 2147483647, %v1016
      %vm1019 = vcmp.le.f32.partialorder %v1018, 0.7853982
      %vm1020 = vcmp.lt.s32.totalorder %v1016, 0
      %v1021 = vand.u32 %v1016, 2139095040
      %v1022 = vshrl.u32 %v1021, 23
      %v1023 = vsub.s32 %v1022, 127
      %v1024 = vand.u32 2147483647, %v1016
      %v1025 = vand.u32 %v1024, 8388607
      %v1026 = vor.u32 %v1025, 8388608
      %v1027 = vsub.s32 0, %v1026
      %v1028 = vadd.s32 %v1023, 1
      %vm1029 = vcmp.gt.s32.totalorder %v1028, 0
      %v1030 = vsel %vm1029, %v1028, 0
      %v1031 = vshrl.u32 %v1030, 5
      %v1032 = vand.u32 %v1030, 31
      %v1033 = vsub.s32 32, %v1032
      %v1034 = vshrl.u32 683565275, %v1033
      %v1035 = vshll.u32 683565275, %v1032
      %v1036 = vshrl.u32 2475754826, %v1033
      %v1037 = vor.u32 %v1035, %v1036
      %v1038 = vshll.u32 2475754826, %v1032
      %v1039 = vshrl.u32 2131351028, %v1033
      %v1040 = vor.u32 %v1038, %v1039
      %v1041 = vshll.u32 2131351028, %v1032
      %v1042 = vshrl.u32 2102212464, %v1033
      %v1043 = vor.u32 %v1041, %v1042
      %v1044 = vshll.u32 2102212464, %v1032
      %v1045 = vshrl.u32 920167782, %v1033
      %v1046 = vor.u32 %v1044, %v1045
      %v1047 = vshll.u32 920167782, %v1032
      %v1048 = vshrl.u32 1326507024, %v1033
      %v1049 = vor.u32 %v1047, %v1048
      %vm1050 = vcmp.lt.s32.totalorder %v1031, 1
      %vm1051 = vcmp.lt.s32.totalorder %v1031, 2
      %vm1052 = vcmp.lt.s32.totalorder %v1031, 3
      %vm1053 = vcmp.lt.s32.totalorder %v1031, 4
      %v1054 = vsel %vm1050, %v1034, %v1037
      %v1055 = vsel %vm1053, %v1043, 2102212464
      %v1056 = vsel %vm1052, %v1040, %v1055
      %v1057 = vsel %vm1051, %v1054, %v1056
      %v1058 = vsel %vm1050, %v1037, %v1040
      %v1059 = vsel %vm1053, %v1046, 920167782
      %v1060 = vsel %vm1052, %v1043, %v1059
      %v1061 = vsel %vm1051, %v1058, %v1060
      %v1062 = vsel %vm1050, %v1040, %v1043
      %v1063 = vsel %vm1053, %v1049, 1326507024
      %v1064 = vsel %vm1052, %v1046, %v1063
      %v1065 = vsel %vm1051, %v1062, %v1064
      %v1066 = vshll.u32 %v1026, 8
      %v1067 = vmul.u32.u64.compose %v1066, %v1065
      %v1068 = vextract.low.u32 %v1067
      %v1069 = vextract.high.u32 %v1067
      %v1070 = vmul.u32.u64.compose %v1066, %v1061
      %v1071 = vextract.low.u32 %v1070
      %v1072 = vextract.high.u32 %v1070
      %v1073 = vmul.u32 %v1066, %v1057
      %v1074 = vadd.s32 %v1069, %v1071
      %vm1075 = vc.u32 %v1069, %v1071
      %v1076 = vadd.s32 %v1072, 1
      %v1077 = vsel %vm1075, %v1076, %v1072
      %v1078 = vadd.s32 %v1073, %v1077
      %v1079 = vadd.s32 %v1078, 536870912
      %v1080 = vshrl.u32 %v1079, 30
      %v1081 = vshll.u32 %v1080, 30
      %v1082 = vsub.s32 %v1078, %v1081
      %vm1083 = vcmp.lt.s32.totalorder %v1082, 0
      %v1084 = vsub.s32 0, %v1082
      %v1085 = vsel %vm1083, %v1084, %v1082
      %v1086 = vclz %v1085
      %v1087 = vsub.s32 %v1086, 2
      %vm1088 = vcmp.gt.s32.totalorder 0, %v1087
      %v1089 = vsel %vm1088, 0, %v1087
      %v1090 = vsub.s32 32, %v1089
      %v1091 = vshll.u32 %v1082, %v1089
      %v1092 = vshrl.u32 %v1074, %v1090
      %v1093 = vor.u32 %v1091, %v1092
      %v1094 = vsub.s32 4294967266, %v1089
      %v1095 = vadd.s32 %v1094, 127
      %v1096 = vshll.u32 %v1095, 23
      %v1097 = vor.u32 4788187, %v1096
      %v1098 = vand.u32 2147483647, %v1097
      %v1100 = vcvt.s32.f32 %v1093
      %v1101 = vmul.f32 %v1100, %v1098
      %v1102 = vxor.u32 %v1101, 2147483648
      %v1103 = vsel %vm1020, %v1102, %v1101
      %v1104 = vsub.s32 4, %v1080
      %v1105 = vsel %vm1020, %v1104, %v1080
      %v1106 = vsel %vm1019, %v1016, %v1103
      %v1107 = vsel %vm1019, 0, %v1105
      %v1108 = vcosq.f32.pop %v1106
      %v1109 = vsinq.f32.pop %v1106
      %vm1110 = vweird.f32 %v1016
      %v1111 = vadd.s32 %v1107, 3
      %v1112 = vand.u32 %v1111, 3
      %vm1113 = vcmp.lt.s32.totalorder %v1112, 2
      %vm1114 = vcmp.eq.s32.totalorder %v1112, 0
      %v1115 = vxor.u32 %v1109, 2147483648
      %v1116 = vsel %vm1114, %v1108, %v1115
      %vm1117 = vcmp.eq.s32.totalorder %v1112, 2
      %v1118 = vxor.u32 %v1108, 2147483648
      %v1119 = vsel %vm1117, %v1118, %v1109
      %v1120 = vsel %vm1113, %v1116, %v1119
      %v1121 = vsel %vm1110, nan, %v1120
      %v1122 = vand.u32 2147483647, %v1017
      %vm1123 = vcmp.le.f32.partialorder %v1122, 0.7853982
      %vm1124 = vcmp.lt.s32.totalorder %v1017, 0
      %v1125 = vand.u32 %v1017, 2139095040
      %v1126 = vshrl.u32 %v1125, 23
      %v1127 = vsub.s32 %v1126, 127
      %v1128 = vand.u32 2147483647, %v1017
      %v1129 = vand.u32 %v1128, 8388607
      %v1130 = vor.u32 %v1129, 8388608
      %v1131 = vsub.s32 0, %v1130
      %v1132 = vadd.s32 %v1127, 1
      %vm1133 = vcmp.gt.s32.totalorder %v1132, 0
      %v1134 = vsel %vm1133, %v1132, 0
      %v1135 = vshrl.u32 %v1134, 5
      %v1136 = vand.u32 %v1134, 31
      %v1137 = vsub.s32 32, %v1136
      %v1138 = vshrl.u32 683565275, %v1137
      %v1139 = vshll.u32 683565275, %v1136
      %v1140 = vshrl.u32 2475754826, %v1137
      %v1141 = vor.u32 %v1139, %v1140
      %v1142 = vshll.u32 2475754826, %v1136
      %v1143 = vshrl.u32 2131351028, %v1137
      %v1144 = vor.u32 %v1142, %v1143
      %v1145 = vshll.u32 2131351028, %v1136
      %v1146 = vshrl.u32 2102212464, %v1137
      %v1147 = vor.u32 %v1145, %v1146
      %v1148 = vshll.u32 2102212464, %v1136
      %v1149 = vshrl.u32 920167782, %v1137
      %v1150 = vor.u32 %v1148, %v1149
      %v1151 = vshll.u32 920167782, %v1136
      %v1152 = vshrl.u32 1326507024, %v1137
      %v1153 = vor.u32 %v1151, %v1152
      %vm1154 = vcmp.lt.s32.totalorder %v1135, 1
      %vm1155 = vcmp.lt.s32.totalorder %v1135, 2
      %vm1156 = vcmp.lt.s32.totalorder %v1135, 3
      %vm1157 = vcmp.lt.s32.totalorder %v1135, 4
      %v1158 = vsel %vm1154, %v1138, %v1141
      %v1159 = vsel %vm1157, %v1147, 2102212464
      %v1160 = vsel %vm1156, %v1144, %v1159
      %v1161 = vsel %vm1155, %v1158, %v1160
      %v1162 = vsel %vm1154, %v1141, %v1144
      %v1163 = vsel %vm1157, %v1150, 920167782
      %v1164 = vsel %vm1156, %v1147, %v1163
      %v1165 = vsel %vm1155, %v1162, %v1164
      %v1166 = vsel %vm1154, %v1144, %v1147
      %v1167 = vsel %vm1157, %v1153, 1326507024
      %v1168 = vsel %vm1156, %v1150, %v1167
      %v1169 = vsel %vm1155, %v1166, %v1168
      %v1170 = vshll.u32 %v1130, 8
      %v1171 = vmul.u32.u64.compose %v1170, %v1169
      %v1172 = vextract.low.u32 %v1171
      %v1173 = vextract.high.u32 %v1171
      %v1174 = vmul.u32.u64.compose %v1170, %v1165
      %v1175 = vextract.low.u32 %v1174
      %v1176 = vextract.high.u32 %v1174
      %v1177 = vmul.u32 %v1170, %v1161
      %v1178 = vadd.s32 %v1173, %v1175
      %vm1179 = vc.u32 %v1173, %v1175
      %v1180 = vadd.s32 %v1176, 1
      %v1181 = vsel %vm1179, %v1180, %v1176
      %v1182 = vadd.s32 %v1177, %v1181
      %v1183 = vadd.s32 %v1182, 536870912
      %v1184 = vshrl.u32 %v1183, 30
      %v1185 = vshll.u32 %v1184, 30
      %v1186 = vsub.s32 %v1182, %v1185
      %vm1187 = vcmp.lt.s32.totalorder %v1186, 0
      %v1188 = vsub.s32 0, %v1186
      %v1189 = vsel %vm1187, %v1188, %v1186
      %v1190 = vclz %v1189
      %v1191 = vsub.s32 %v1190, 2
      %vm1192 = vcmp.gt.s32.totalorder 0, %v1191
      %v1193 = vsel %vm1192, 0, %v1191
      %v1194 = vsub.s32 32, %v1193
      %v1195 = vshll.u32 %v1186, %v1193
      %v1196 = vshrl.u32 %v1178, %v1194
      %v1197 = vor.u32 %v1195, %v1196
      %v1198 = vsub.s32 4294967266, %v1193
      %v1199 = vadd.s32 %v1198, 127
      %v1200 = vshll.u32 %v1199, 23
      %v1201 = vor.u32 4788187, %v1200
      %v1202 = vand.u32 2147483647, %v1201
      %v1204 = vcvt.s32.f32 %v1197
      %v1205 = vmul.f32 %v1204, %v1202
      %v1206 = vxor.u32 %v1205, 2147483648
      %v1207 = vsel %vm1124, %v1206, %v1205
      %v1208 = vsub.s32 4, %v1184
      %v1209 = vsel %vm1124, %v1208, %v1184
      %v1210 = vsel %vm1123, %v1017, %v1207
      %v1211 = vsel %vm1123, 0, %v1209
      %v1212 = vcosq.f32.pop %v1210
      %v1213 = vsinq.f32.pop %v1210
      %vm1214 = vweird.f32 %v1017
      %v1215 = vadd.s32 %v1211, 3
      %v1216 = vand.u32 %v1215, 3
      %vm1217 = vcmp.lt.s32.totalorder %v1216, 2
      %vm1218 = vcmp.eq.s32.totalorder %v1216, 0
      %v1219 = vxor.u32 %v1213, 2147483648
      %v1220 = vsel %vm1218, %v1212, %v1219
      %vm1221 = vcmp.eq.s32.totalorder %v1216, 2
      %v1222 = vxor.u32 %v1212, 2147483648
      %v1223 = vsel %vm1221, %v1222, %v1213
      %v1224 = vsel %vm1217, %v1220, %v1223
      %v1225 = vsel %vm1214, nan, %v1224
      %v1226 = vand.u32 2147483647, %v1016
      %vm1227 = vcmp.le.f32.partialorder %v1226, 0.7853982
      %vm1228 = vcmp.lt.s32.totalorder %v1016, 0
      %v1229 = vand.u32 %v1016, 2139095040
      %v1230 = vshrl.u32 %v1229, 23
      %v1231 = vsub.s32 %v1230, 127
      %v1232 = vand.u32 2147483647, %v1016
      %v1233 = vand.u32 %v1232, 8388607
      %v1234 = vor.u32 %v1233, 8388608
      %v1235 = vsub.s32 0, %v1234
      %v1236 = vadd.s32 %v1231, 1
      %vm1237 = vcmp.gt.s32.totalorder %v1236, 0
      %v1238 = vsel %vm1237, %v1236, 0
      %v1239 = vshrl.u32 %v1238, 5
      %v1240 = vand.u32 %v1238, 31
      %v1241 = vsub.s32 32, %v1240
      %v1242 = vshrl.u32 683565275, %v1241
      %v1243 = vshll.u32 683565275, %v1240
      %v1244 = vshrl.u32 2475754826, %v1241
      %v1245 = vor.u32 %v1243, %v1244
      %v1246 = vshll.u32 2475754826, %v1240
      %v1247 = vshrl.u32 2131351028, %v1241
      %v1248 = vor.u32 %v1246, %v1247
      %v1249 = vshll.u32 2131351028, %v1240
      %v1250 = vshrl.u32 2102212464, %v1241
      %v1251 = vor.u32 %v1249, %v1250
      %v1252 = vshll.u32 2102212464, %v1240
      %v1253 = vshrl.u32 920167782, %v1241
      %v1254 = vor.u32 %v1252, %v1253
      %v1255 = vshll.u32 920167782, %v1240
      %v1256 = vshrl.u32 1326507024, %v1241
      %v1257 = vor.u32 %v1255, %v1256
      %vm1258 = vcmp.lt.s32.totalorder %v1239, 1
      %vm1259 = vcmp.lt.s32.totalorder %v1239, 2
      %vm1260 = vcmp.lt.s32.totalorder %v1239, 3
      %vm1261 = vcmp.lt.s32.totalorder %v1239, 4
      %v1262 = vsel %vm1258, %v1242, %v1245
      %v1263 = vsel %vm1261, %v1251, 2102212464
      %v1264 = vsel %vm1260, %v1248, %v1263
      %v1265 = vsel %vm1259, %v1262, %v1264
      %v1266 = vsel %vm1258, %v1245, %v1248
      %v1267 = vsel %vm1261, %v1254, 920167782
      %v1268 = vsel %vm1260, %v1251, %v1267
      %v1269 = vsel %vm1259, %v1266, %v1268
      %v1270 = vsel %vm1258, %v1248, %v1251
      %v1271 = vsel %vm1261, %v1257, 1326507024
      %v1272 = vsel %vm1260, %v1254, %v1271
      %v1273 = vsel %vm1259, %v1270, %v1272
      %v1274 = vshll.u32 %v1234, 8
      %v1275 = vmul.u32.u64.compose %v1274, %v1273
      %v1276 = vextract.low.u32 %v1275
      %v1277 = vextract.high.u32 %v1275
      %v1278 = vmul.u32.u64.compose %v1274, %v1269
      %v1279 = vextract.low.u32 %v1278
      %v1280 = vextract.high.u32 %v1278
      %v1281 = vmul.u32 %v1274, %v1265
      %v1282 = vadd.s32 %v1277, %v1279
      %vm1283 = vc.u32 %v1277, %v1279
      %v1284 = vadd.s32 %v1280, 1
      %v1285 = vsel %vm1283, %v1284, %v1280
      %v1286 = vadd.s32 %v1281, %v1285
      %v1287 = vadd.s32 %v1286, 536870912
      %v1288 = vshrl.u32 %v1287, 30
      %v1289 = vshll.u32 %v1288, 30
      %v1290 = vsub.s32 %v1286, %v1289
      %vm1291 = vcmp.lt.s32.totalorder %v1290, 0
      %v1292 = vsub.s32 0, %v1290
      %v1293 = vsel %vm1291, %v1292, %v1290
      %v1294 = vclz %v1293
      %v1295 = vsub.s32 %v1294, 2
      %vm1296 = vcmp.gt.s32.totalorder 0, %v1295
      %v1297 = vsel %vm1296, 0, %v1295
      %v1298 = vsub.s32 32, %v1297
      %v1299 = vshll.u32 %v1290, %v1297
      %v1300 = vshrl.u32 %v1282, %v1298
      %v1301 = vor.u32 %v1299, %v1300
      %v1302 = vsub.s32 4294967266, %v1297
      %v1303 = vadd.s32 %v1302, 127
      %v1304 = vshll.u32 %v1303, 23
      %v1305 = vor.u32 4788187, %v1304
      %v1306 = vand.u32 2147483647, %v1305
      %v1308 = vcvt.s32.f32 %v1301
      %v1309 = vmul.f32 %v1308, %v1306
      %v1310 = vxor.u32 %v1309, 2147483648
      %v1311 = vsel %vm1228, %v1310, %v1309
      %v1312 = vsub.s32 4, %v1288
      %v1313 = vsel %vm1228, %v1312, %v1288
      %v1314 = vsel %vm1227, %v1016, %v1311
      %v1315 = vsel %vm1227, 0, %v1313
      %v1316 = vcosq.f32.pop %v1314
      %v1317 = vsinq.f32.pop %v1314
      %vm1318 = vweird.f32 %v1016
      %v1319 = vand.u32 %v1315, 3
      %vm1320 = vcmp.lt.s32.totalorder %v1319, 2
      %vm1321 = vcmp.eq.s32.totalorder %v1319, 0
      %v1322 = vxor.u32 %v1317, 2147483648
      %v1323 = vsel %vm1321, %v1316, %v1322
      %vm1324 = vcmp.eq.s32.totalorder %v1319, 2
      %v1325 = vxor.u32 %v1316, 2147483648
      %v1326 = vsel %vm1324, %v1325, %v1317
      %v1327 = vsel %vm1320, %v1323, %v1326
      %v1328 = vsel %vm1318, nan, %v1327
      %v1329 = vand.u32 2147483647, %v1017
      %vm1330 = vcmp.le.f32.partialorder %v1329, 0.7853982
      %vm1331 = vcmp.lt.s32.totalorder %v1017, 0
      %v1332 = vand.u32 %v1017, 2139095040
      %v1333 = vshrl.u32 %v1332, 23
      %v1334 = vsub.s32 %v1333, 127
      %v1335 = vand.u32 2147483647, %v1017
      %v1336 = vand.u32 %v1335, 8388607
      %v1337 = vor.u32 %v1336, 8388608
      %v1338 = vsub.s32 0, %v1337
      %v1339 = vadd.s32 %v1334, 1
      %vm1340 = vcmp.gt.s32.totalorder %v1339, 0
      %v1341 = vsel %vm1340, %v1339, 0
      %v1342 = vshrl.u32 %v1341, 5
      %v1343 = vand.u32 %v1341, 31
      %v1344 = vsub.s32 32, %v1343
      %v1345 = vshrl.u32 683565275, %v1344
      %v1346 = vshll.u32 683565275, %v1343
      %v1347 = vshrl.u32 2475754826, %v1344
      %v1348 = vor.u32 %v1346, %v1347
      %v1349 = vshll.u32 2475754826, %v1343
      %v1350 = vshrl.u32 2131351028, %v1344
      %v1351 = vor.u32 %v1349, %v1350
      %v1352 = vshll.u32 2131351028, %v1343
      %v1353 = vshrl.u32 2102212464, %v1344
      %v1354 = vor.u32 %v1352, %v1353
      %v1355 = vshll.u32 2102212464, %v1343
      %v1356 = vshrl.u32 920167782, %v1344
      %v1357 = vor.u32 %v1355, %v1356
      %v1358 = vshll.u32 920167782, %v1343
      %v1359 = vshrl.u32 1326507024, %v1344
      %v1360 = vor.u32 %v1358, %v1359
      %vm1361 = vcmp.lt.s32.totalorder %v1342, 1
      %vm1362 = vcmp.lt.s32.totalorder %v1342, 2
      %vm1363 = vcmp.lt.s32.totalorder %v1342, 3
      %vm1364 = vcmp.lt.s32.totalorder %v1342, 4
      %v1365 = vsel %vm1361, %v1345, %v1348
      %v1366 = vsel %vm1364, %v1354, 2102212464
      %v1367 = vsel %vm1363, %v1351, %v1366
      %v1368 = vsel %vm1362, %v1365, %v1367
      %v1369 = vsel %vm1361, %v1348, %v1351
      %v1370 = vsel %vm1364, %v1357, 920167782
      %v1371 = vsel %vm1363, %v1354, %v1370
      %v1372 = vsel %vm1362, %v1369, %v1371
      %v1373 = vsel %vm1361, %v1351, %v1354
      %v1374 = vsel %vm1364, %v1360, 1326507024
      %v1375 = vsel %vm1363, %v1357, %v1374
      %v1376 = vsel %vm1362, %v1373, %v1375
      %v1377 = vshll.u32 %v1337, 8
      %v1378 = vmul.u32.u64.compose %v1377, %v1376
      %v1379 = vextract.low.u32 %v1378
      %v1380 = vextract.high.u32 %v1378
      %v1381 = vmul.u32.u64.compose %v1377, %v1372
      %v1382 = vextract.low.u32 %v1381
      %v1383 = vextract.high.u32 %v1381
      %v1384 = vmul.u32 %v1377, %v1368
      %v1385 = vadd.s32 %v1380, %v1382
      %vm1386 = vc.u32 %v1380, %v1382
      %v1387 = vadd.s32 %v1383, 1
      %v1388 = vsel %vm1386, %v1387, %v1383
      %v1389 = vadd.s32 %v1384, %v1388
      %v1390 = vadd.s32 %v1389, 536870912
      %v1391 = vshrl.u32 %v1390, 30
      %v1392 = vshll.u32 %v1391, 30
      %v1393 = vsub.s32 %v1389, %v1392
      %vm1394 = vcmp.lt.s32.totalorder %v1393, 0
      %v1395 = vsub.s32 0, %v1393
      %v1396 = vsel %vm1394, %v1395, %v1393
      %v1397 = vclz %v1396
      %v1398 = vsub.s32 %v1397, 2
      %vm1399 = vcmp.gt.s32.totalorder 0, %v1398
      %v1400 = vsel %vm1399, 0, %v1398
      %v1401 = vsub.s32 32, %v1400
      %v1402 = vshll.u32 %v1393, %v1400
      %v1403 = vshrl.u32 %v1385, %v1401
      %v1404 = vor.u32 %v1402, %v1403
      %v1405 = vsub.s32 4294967266, %v1400
      %v1406 = vadd.s32 %v1405, 127
      %v1407 = vshll.u32 %v1406, 23
      %v1408 = vor.u32 4788187, %v1407
      %v1409 = vand.u32 2147483647, %v1408
      %v1411 = vcvt.s32.f32 %v1404
      %v1412 = vmul.f32 %v1411, %v1409
      %v1413 = vxor.u32 %v1412, 2147483648
      %v1414 = vsel %vm1331, %v1413, %v1412
      %v1415 = vsub.s32 4, %v1391
      %v1416 = vsel %vm1331, %v1415, %v1391
      %v1417 = vsel %vm1330, %v1017, %v1414
      %v1418 = vsel %vm1330, 0, %v1416
      %v1419 = vcosq.f32.pop %v1417
      %v1420 = vsinq.f32.pop %v1417
      %vm1421 = vweird.f32 %v1017
      %v1422 = vand.u32 %v1418, 3
      %vm1423 = vcmp.lt.s32.totalorder %v1422, 2
      %vm1424 = vcmp.eq.s32.totalorder %v1422, 0
      %v1425 = vxor.u32 %v1420, 2147483648
      %v1426 = vsel %vm1424, %v1419, %v1425
      %vm1427 = vcmp.eq.s32.totalorder %v1422, 2
      %v1428 = vxor.u32 %v1419, 2147483648
      %v1429 = vsel %vm1427, %v1428, %v1420
      %v1430 = vsel %vm1423, %v1426, %v1429
      %v1431 = vsel %vm1421, nan, %v1430
      %1434 = vrot.lane.b32.xlu0 %v697, 60
      %v1435 = vpop.permute.xlu0 %1434
      %1436 = vrot.lane.b32.xlu0 %v801, 60
      %v1437 = vpop.permute.xlu0 %1436
      %1442 = vrot.lane.b32.xlu0 %v1121, 120
      %v1443 = vpop.permute.xlu0 %1442
      %1444 = vrot.lane.b32.xlu0 %v1225, 120
      %v1445 = vpop.permute.xlu0 %1444
      %1450 = vrot.lane.b32.xlu0 %v480, 52
      %v1451 = vpop.permute.xlu0 %1450
      %1452 = vrot.lane.b32.xlu0 %v583, 52
      %v1453 = vpop.permute.xlu0 %1452
      %1458 = vrot.lane.b32.xlu0 %v904, 112
      %v1459 = vpop.permute.xlu0 %1458
      %1460 = vrot.lane.b32.xlu0 %v1007, 112
      %v1461 = vpop.permute.xlu0 %1460
      %1466 = vrot.lane.b32.xlu0 %v1328, 44
      %v1467 = vpop.permute.xlu0 %1466
      %1468 = vrot.lane.b32.xlu0 %v1431, 44
      %v1469 = vpop.permute.xlu0 %1468
      %vm1472 = vcmask 490496
      %v1473 = vsel %vm1472, %v273, %v1435
      %v1474 = vsel %vm1472, %v377, %v1437
      %vm1475 = vcmask 982016
      %v1476 = vsel %vm1475, %v1473, %v1443
      %v1477 = vsel %vm1475, %v1474, %v1445
      %vm1478 = vcmask 424960
      %v1479 = vsel %vm1478, %v1443, %v1451
      %v1480 = vsel %vm1478, %v1445, %v1453
      %vm1481 = vcmask 916480
      %v1482 = vsel %vm1481, %v1479, %v1459
      %v1483 = vsel %vm1481, %v1480, %v1461
      %vm1484 = vcmask 359424
      %v1485 = vsel %vm1484, %v1459, %v1467
      %v1486 = vsel %vm1484, %v1461, %v1469
      %1487 = vst [vmem:[%s147] sm:$0xff] %v1476
      %1488 = vst [vmem:[%s147 + $0x8] sm:$0xff] %v1482
      %vm1489 = vcmask 850944
      %1490 = vst.msk [vmem:[%s147 + $0x10] sm:$0xff] %vm1489, %v1485
      %1491 = vst [vmem:[%s147 + $0x18] sm:$0xff] %v1477
      %1492 = vst [vmem:[%s147 + $0x20] sm:$0xff] %v1483
      %1493 = vst.msk [vmem:[%s147 + $0x28] sm:$0xff] %vm1489, %v1486
      %s1494 = smul.u32 2, %s13
      %p1495 = scmp.lt.s32.totalorder %s1494, 15
      %s1496 = scalar_select %p1495, %s1494, 15
      %s1497 = smul.addr %s1496, 3
      %s1498 = smul.addr %s1497, 8
      %s1499 = scalar_lea.vmem %s2, %s1498
      // Predicated region
      $region29: #{tpu_custom_call.1} parent=27 // pred_check
        %p1500 = pneg %p78
      $region30: #{tpu_custom_call.1} parent=27 // pred_check_branch
        %1502 = sbr.rel (%p1500) target = $region32
      $region31: #{tpu_custom_call.1} parent=27 // pred_region
        %s1503 = smul.u32 2, %s13
      $region32: #{tpu_custom_call.1} parent=27 // pred_fallthru
        _
    $region28: #{tpu_custom_call.1} parent=5 // pred_fallthru
      _
    %p1504 = scmp.le.s32.totalorder 2, %s8
    // Predicated region
    $region33: #{tpu_custom_call.1} parent=5 // pred_check
      %p1505 = pneg %p1504
    $region34: #{tpu_custom_call.1} parent=5 // pred_check_branch
      %1507 = sbr.rel (%p1505) target = $region36
    $region35: #{tpu_custom_call.1} parent=5 // pred_region
      %s1508 = ssub.s32 %s8, 2
      // Predicated region
      $region37: #{tpu_custom_call.1} parent=35 // pred_check
        %p1509 = pneg %p84
      $region38: #{tpu_custom_call.1} parent=35 // pred_check_branch
        %1511 = sbr.rel (%p1509) target = $region40
      $region39: #{tpu_custom_call.1} parent=35 // pred_region
        %s1512 = smul.u32 2, %s14
        %p1513 = scmp.lt.s32.totalorder %s1512, 15
        %s1514 = scalar_select %p1513, %s1512, 15
        %s1515 = smul.addr %s1514, 3
        %s1516 = smul.addr %s1515, 8
        %s1517 = scalar_lea.vmem %s2, %s1516
      $region40: #{tpu_custom_call.1} parent=35 // pred_fallthru
        _
    $region36: #{tpu_custom_call.1} parent=5 // pred_fallthru
      _
  $region6: #{tpu_custom_call.1} parent=0 // loop_footer
    %s12 = sadd.s32 1, %s8
  $region7: #{tpu_custom_call.1} parent=0 // loop_footer_branch
    %7 = sbr.rel target = $region3
  $region8: #{tpu_custom_call.1} parent=0 // loop_exit
    _

</llo_original>
